<compile_context>
chip_gen: v5e
topology: v5e:2x2
jax: 0.10.0
libtpu: 0.0.40
codegen_flags: <defaults>
</compile_context>

<pallas_src>
import jax
import jax.numpy as jnp
from jax.experimental import pallas as pl
from jax.experimental.pallas import tpu as pltpu

INPUT_SIZE = 1
HIDDEN_SIZE = 128
OUTPUT_SIZE = 1


def _round_up(n, m):
    return ((n + m - 1) // m) * m


def stock_predictor_kernel(x_ref, w1_ref, b1_ref, w2_ref, b2_ref, o_ref):
    # x_ref : (1, TB)           batch on lanes
    # w1_ref: (HIDDEN, 1)       fc1 weight column
    # b1_ref: (HIDDEN, 1)       fc1 bias column
    # w2_ref: (HIDDEN, 1)       fc2 weight column
    # b2_ref: (1, 1) in SMEM    fc2 bias scalar
    # o_ref : (1, TB)           lane-dense output
    x = x_ref[...]                                        # (1, TB)
    # fc1 + ReLU: broadcast "outer product" on the VPU (no MXU).
    h = w1_ref[...] * x + b1_ref[...]                     # (HIDDEN, TB)
    h = jnp.maximum(h, 0.0)
    # fc2: elementwise multiply + reduce over the hidden (sublane) axis.
    y = jnp.sum(h * w2_ref[...], axis=0, keepdims=True)   # (1, TB)
    o_ref[...] = (y + b2_ref[0, 0]).astype(o_ref.dtype)


def stock_predictor_forward(x, w1c, b1c, w2c, b2, *, block_b=1024):
    """x: (B, INPUT_SIZE) f32 -> (B, OUTPUT_SIZE) f32."""
    B = x.shape[0]
    # Put batch on the lane axis ((B,1) and (1,B) are the same B contiguous floats).
    xr = x.reshape(1, B)

    # Lane tile: multiple of 128, capped at block_b; pad batch to a tile multiple
    # (padded columns are sliced off below, so their garbage values are harmless).
    tb = max(128, min(block_b, _round_up(B, 128)))
    tb = _round_up(tb, 128)
    bp = _round_up(B, tb)
    if bp != B:
        xr = jnp.pad(xr, ((0, 0), (0, bp - B)))

    y = pl.pallas_call(
        stock_predictor_kernel,
        out_shape=jax.ShapeDtypeStruct((1, bp), x.dtype),
        grid=(bp // tb,),
        in_specs=[
            pl.BlockSpec((1, tb), lambda i: (0, i)),               # x tile (streamed)
            pl.BlockSpec((HIDDEN_SIZE, 1), lambda i: (0, 0)),      # w1 (resident)
            pl.BlockSpec((HIDDEN_SIZE, 1), lambda i: (0, 0)),      # b1 (resident)
            pl.BlockSpec((HIDDEN_SIZE, 1), lambda i: (0, 0)),      # w2 (resident)
            pl.BlockSpec(memory_space=pltpu.MemorySpace.SMEM),     # b2 scalar in SMEM
        ],
        out_specs=pl.BlockSpec((1, tb), lambda i: (0, i)),
        compiler_params=pltpu.CompilerParams(
            dimension_semantics=("parallel",),
        ),
    )(xr, w1c, b1c, w2c, b2)
    return y[:, :B].reshape(B, OUTPUT_SIZE)


def init_params(key):
    # Deterministic init mimicking nn.Linear (uniform in +-1/sqrt(fan_in)),
    # stored directly in the kernel's column layout.
    k1, k2, k3, k4 = jax.random.split(key, 4)
    bound1 = 1.0 / (INPUT_SIZE ** 0.5)
    bound2 = 1.0 / (HIDDEN_SIZE ** 0.5)
    w1c = jax.random.uniform(k1, (HIDDEN_SIZE, INPUT_SIZE), jnp.float32, -bound1, bound1)
    b1c = jax.random.uniform(k2, (HIDDEN_SIZE, 1), jnp.float32, -bound1, bound1)
    w2c = jax.random.uniform(k3, (HIDDEN_SIZE, OUTPUT_SIZE), jnp.float32, -bound2, bound2)
    b2 = jax.random.uniform(k4, (1, 1), jnp.float32, -bound2, bound2)
    return w1c, b1c, w2c, b2


def _reference(x, w1c, b1c, w2c, b2):
    h = jnp.maximum(x @ w1c.T + b1c.T, 0.0)   # (B, HIDDEN)
    return h @ w2c + b2                        # (B, 1)


if __name__ == "__main__":
    key = jax.random.PRNGKey(0)
    kx, kp = jax.random.split(key)
    w1c, b1c, w2c, b2 = init_params(kp)

    # Small demo batch (padded to one 128-lane tile inside the wrapper).
    batch = 8
    x = jax.random.normal(kx, (batch, INPUT_SIZE), jnp.float32)
    out = jax.block_until_ready(stock_predictor_forward(x, w1c, b1c, w2c, b2))
    ref = _reference(x, w1c, b1c, w2c, b2)
    assert out.shape == (batch, OUTPUT_SIZE)
    assert jnp.allclose(out, ref, atol=1e-5, rtol=1e-5)

    # Multi-tile path: batch not a multiple of the lane tile, grid > 1.
    batch2 = 300
    x2 = jax.random.normal(jax.random.PRNGKey(1), (batch2, INPUT_SIZE), jnp.float32)
    out2 = jax.block_until_ready(
        stock_predictor_forward(x2, w1c, b1c, w2c, b2, block_b=128))
    ref2 = _reference(x2, w1c, b1c, w2c, b2)
    assert out2.shape == (batch2, OUTPUT_SIZE)
    assert jnp.allclose(out2, ref2, atol=1e-5, rtol=1e-5)

    print("KERNEL_OK")
</pallas_src>

<mosaic_0001>
module attributes {stable_mosaic.version = 11 : i64} {
  func.func @stock_predictor_kernel(%arg0: i32, %arg1: memref<1x128xf32, #tpu.memory_space<vmem>>, %arg2: memref<128x1xf32, #tpu.memory_space<vmem>>, %arg3: memref<128x1xf32, #tpu.memory_space<vmem>>, %arg4: memref<128x1xf32, #tpu.memory_space<vmem>>, %arg5: memref<1x1xf32, #tpu.memory_space<smem>>, %arg6: memref<1x128xf32, #tpu.memory_space<vmem>>) attributes {dimension_semantics = [#tpu.dimension_semantics<parallel>], iteration_bounds = array<i64: 1>, scalar_prefetch = 0 : i64, scratch_operands = 0 : i64, tpu.core_type = #tpu.core_type<tc>, window_params = [{transform_indices = @transform_0, window_bounds = array<i64: 1, 128>}, {pipeline_mode = #tpu.pipeline_mode<synchronous>, transform_indices = @transform_1, window_bounds = array<i64: 128, 1>}, {pipeline_mode = #tpu.pipeline_mode<synchronous>, transform_indices = @transform_2, window_bounds = array<i64: 128, 1>}, {pipeline_mode = #tpu.pipeline_mode<synchronous>, transform_indices = @transform_3, window_bounds = array<i64: 128, 1>}, {transform_indices = @transform_4, window_bounds = array<i64: 1, 1>}, {transform_indices = @transform_5, window_bounds = array<i64: 1, 128>}]} {
    %c0 = arith.constant 0 : index
    %c0_0 = arith.constant 0 : index
    %0 = vector.load %arg1[%c0, %c0_0] : memref<1x128xf32, #tpu.memory_space<vmem>>, vector<1x128xf32>
    %c0_1 = arith.constant 0 : index
    %c0_2 = arith.constant 0 : index
    %1 = vector.load %arg2[%c0_1, %c0_2] : memref<128x1xf32, #tpu.memory_space<vmem>>, vector<128x1xf32>
    %2 = vector.broadcast %1 : vector<128x1xf32> to vector<128x128xf32>
    %3 = vector.broadcast %0 : vector<1x128xf32> to vector<128x128xf32>
    %4 = arith.mulf %2, %3 : vector<128x128xf32>
    %c0_3 = arith.constant 0 : index
    %c0_4 = arith.constant 0 : index
    %5 = vector.load %arg3[%c0_3, %c0_4] : memref<128x1xf32, #tpu.memory_space<vmem>>, vector<128x1xf32>
    %6 = vector.broadcast %5 : vector<128x1xf32> to vector<128x128xf32>
    %7 = arith.addf %4, %6 : vector<128x128xf32>
    %cst = arith.constant 0.000000e+00 : f32
    %8 = vector.broadcast %cst : f32 to vector<128x128xf32>
    %9 = arith.maximumf %7, %8 : vector<128x128xf32>
    %c0_5 = arith.constant 0 : index
    %c0_6 = arith.constant 0 : index
    %10 = vector.load %arg4[%c0_5, %c0_6] : memref<128x1xf32, #tpu.memory_space<vmem>>, vector<128x1xf32>
    %11 = vector.broadcast %10 : vector<128x1xf32> to vector<128x128xf32>
    %12 = arith.mulf %9, %11 : vector<128x128xf32>
    %cst_7 = arith.constant dense<0.000000e+00> : vector<128xf32>
    %13 = vector.multi_reduction <add>, %12, %cst_7 [0] : vector<128x128xf32> to vector<128xf32>
    %14 = vector.shape_cast %13 : vector<128xf32> to vector<1x128xf32>
    %c0_8 = arith.constant 0 : index
    %c0_9 = arith.constant 0 : index
    %15 = memref.load %arg5[%c0_8, %c0_9] : memref<1x1xf32, #tpu.memory_space<smem>>
    %16 = vector.broadcast %15 : f32 to vector<1x128xf32>
    %17 = arith.addf %14, %16 : vector<1x128xf32>
    %c0_10 = arith.constant 0 : index
    %c0_11 = arith.constant 0 : index
    %18 = vector.load %arg6[%c0_10, %c0_11] : memref<1x128xf32, #tpu.memory_space<vmem>>, vector<1x128xf32>
    tpu.vector_store %arg6[%c0_10, %c0_11], %17 {strides = array<i32>} : memref<1x128xf32, #tpu.memory_space<vmem>>, vector<1x128xf32>,
    return
  }
  func.func @transform_0(%arg0: i32) -> (i32, i32) {
    %c0_i32 = arith.constant 0 : i32
    %c0_i32_0 = arith.constant 0 : i32
    return %c0_i32, %arg0 : i32, i32
  }
  func.func @transform_1(%arg0: i32) -> (i32, i32) {
    %c0_i32 = arith.constant 0 : i32
    %c0_i32_0 = arith.constant 0 : i32
    %c0_i32_1 = arith.constant 0 : i32
    return %c0_i32, %c0_i32_0 : i32, i32
  }
  func.func @transform_2(%arg0: i32) -> (i32, i32) {
    %c0_i32 = arith.constant 0 : i32
    %c0_i32_0 = arith.constant 0 : i32
    %c0_i32_1 = arith.constant 0 : i32
    return %c0_i32, %c0_i32_0 : i32, i32
  }
  func.func @transform_3(%arg0: i32) -> (i32, i32) {
    %c0_i32 = arith.constant 0 : i32
    %c0_i32_0 = arith.constant 0 : i32
    %c0_i32_1 = arith.constant 0 : i32
    return %c0_i32, %c0_i32_0 : i32, i32
  }
  func.func @transform_4(%arg0: i32) -> (i32, i32) {
    %c0_i32 = arith.constant 0 : i32
    %c0_i32_0 = arith.constant 0 : i32
    %c0_i32_1 = arith.constant 0 : i32
    return %c0_i32, %c0_i32_0 : i32, i32
  }
  func.func @transform_5(%arg0: i32) -> (i32, i32) {
    %c0_i32 = arith.constant 0 : i32
    %c0_i32_0 = arith.constant 0 : i32
    return %c0_i32, %arg0 : i32, i32
  }
}

</mosaic_0001>

<llo_original>
// kernel: tpu_custom_call.1
$region0: #{tpu_custom_call.1}
  #allocation0 [shape = 'u32[]', space=smem, size = 0x4, offset = 0x4, fixed_abs, tag = 'smem constant byte address 0x4 - core index']
  #allocation1 [shape = 'u32[72,128]{1,0:T(1,128)}', space=vmem, size = 0x9000, scoped, tag = 'internal scratch']
  #allocation2 [shape = 'f32[1,1]{1,0:T(1,128)S(6)}', space=smem, size = 0x200, scoped, tag = 'scoped memory for tpu_custom_call.1']
  %s0 = inlined_call_operand.vmem [shape: f32[1,128], index: 0, kind: input, shape index: {}]
  %s1 = inlined_call_operand.vmem [shape: f32[128,1], index: 1, kind: input, shape index: {}]
  %s2 = inlined_call_operand.vmem [shape: f32[128,1], index: 2, kind: input, shape index: {}]
  %s3 = inlined_call_operand.vmem [shape: f32[128,1], index: 3, kind: input, shape index: {}]
  %s4 = inlined_call_operand.<no memory space> [shape: f32[1,1], index: 4, kind: input, shape index: {}]
  %s5 = inlined_call_operand.hbm [shape: f32[1,128], index: 5, kind: output, shape index: {}]
  %s6 = sld [smem:[#allocation0]]
  $region30: #{tpu_custom_call.1} parent=0
    _
  %s8 = ssub.s32 1, %s6
  %s9 = scalar_select 0, %s8, %s6
  %10 = sst [smem:[#allocation2]] %s4
  $region1: #{tpu_custom_call.1} parent=0
    #allocation3 [shape = 'u8[512]{0}', space=vmem, size = 0x400, scoped, tag = 'output window, operand 0, single buffered']
    #allocation4 [shape = 's32[1]{0}', space=sflag, size = 0x4, scoped, tag = 'scoped memory for tpu_custom_call.1']
    %11 = vsyncpa [#allocation4], 0
    // Predicated region
    $region2: #{tpu_custom_call.1} parent=1 // pred_check
      _
    $region3: #{tpu_custom_call.1} parent=1 // pred_check_branch
      %13 = sbr.rel (0) target = $region5
    $region4: #{tpu_custom_call.1} parent=1 // pred_region
      _
    $region5: #{tpu_custom_call.1} parent=1 // pred_fallthru
      _
    // Predicated region
    $region6: #{tpu_custom_call.1} parent=1 // pred_check
      _
    $region7: #{tpu_custom_call.1} parent=1 // pred_check_branch
      %15 = sbr.rel (0) target = $region9
    $region8: #{tpu_custom_call.1} parent=1 // pred_region
      _
    $region9: #{tpu_custom_call.1} parent=1 // pred_fallthru
      _
    // Predicated region
    $region10: #{tpu_custom_call.1} parent=1 // pred_check
      _
    $region11: #{tpu_custom_call.1} parent=1 // pred_check_branch
      %17 = sbr.rel (0) target = $region13
    $region12: #{tpu_custom_call.1} parent=1 // pred_region
      _
    $region13: #{tpu_custom_call.1} parent=1 // pred_fallthru
      _
    // Predicated region
    $region14: #{tpu_custom_call.1} parent=1 // pred_check
      _
    $region15: #{tpu_custom_call.1} parent=1 // pred_check_branch
      %19 = sbr.rel (0) target = $region17
    $region16: #{tpu_custom_call.1} parent=1 // pred_region
      _
    $region17: #{tpu_custom_call.1} parent=1 // pred_fallthru
      _
    // Predicated region
    $region18: #{tpu_custom_call.1} parent=1 // pred_check
      _
    $region19: #{tpu_custom_call.1} parent=1 // pred_check_branch
      %21 = sbr.rel (0) target = $region21
    $region20: #{tpu_custom_call.1} parent=1 // pred_region
      _
    $region21: #{tpu_custom_call.1} parent=1 // pred_fallthru
      _
    %v22 = vld [vmem:[%s0] sm:$0x1]
    %v23 = vld [vmem:[%s1] sm:$0xff]
    %v24 = vld [vmem:[%s1 + $0x8] sm:$0xff]
    %v25 = vld [vmem:[%s1 + $0x10] sm:$0xff]
    %v26 = vld [vmem:[%s1 + $0x18] sm:$0xff]
    %v27 = vld [vmem:[%s1 + $0x20] sm:$0xff]
    %v28 = vld [vmem:[%s1 + $0x28] sm:$0xff]
    %v29 = vld [vmem:[%s1 + $0x30] sm:$0xff]
    %v30 = vld [vmem:[%s1 + $0x38] sm:$0xff]
    %v31 = vld [vmem:[%s1 + $0x40] sm:$0xff]
    %v32 = vld [vmem:[%s1 + $0x48] sm:$0xff]
    %v33 = vld [vmem:[%s1 + $0x50] sm:$0xff]
    %v34 = vld [vmem:[%s1 + $0x58] sm:$0xff]
    %v35 = vld [vmem:[%s1 + $0x60] sm:$0xff]
    %v36 = vld [vmem:[%s1 + $0x68] sm:$0xff]
    %v37 = vld [vmem:[%s1 + $0x70] sm:$0xff]
    %v38 = vld [vmem:[%s1 + $0x78] sm:$0xff]
    %40 = vset.pattern.permute.xlu0 0
    %41 = vperm.xlu0 %40, %v23
    %v42 = vpop.permute.xlu0 %41
    %45 = vset.pattern.permute.xlu0 0
    %46 = vperm.xlu0 %45, %v24
    %v47 = vpop.permute.xlu0 %46
    %50 = vset.pattern.permute.xlu0 0
    %51 = vperm.xlu0 %50, %v25
    %v52 = vpop.permute.xlu0 %51
    %55 = vset.pattern.permute.xlu0 0
    %56 = vperm.xlu0 %55, %v26
    %v57 = vpop.permute.xlu0 %56
    %60 = vset.pattern.permute.xlu0 0
    %61 = vperm.xlu0 %60, %v27
    %v62 = vpop.permute.xlu0 %61
    %65 = vset.pattern.permute.xlu0 0
    %66 = vperm.xlu0 %65, %v28
    %v67 = vpop.permute.xlu0 %66
    %70 = vset.pattern.permute.xlu0 0
    %71 = vperm.xlu0 %70, %v29
    %v72 = vpop.permute.xlu0 %71
    %75 = vset.pattern.permute.xlu0 0
    %76 = vperm.xlu0 %75, %v30
    %v77 = vpop.permute.xlu0 %76
    %80 = vset.pattern.permute.xlu0 0
    %81 = vperm.xlu0 %80, %v31
    %v82 = vpop.permute.xlu0 %81
    %85 = vset.pattern.permute.xlu0 0
    %86 = vperm.xlu0 %85, %v32
    %v87 = vpop.permute.xlu0 %86
    %90 = vset.pattern.permute.xlu0 0
    %91 = vperm.xlu0 %90, %v33
    %v92 = vpop.permute.xlu0 %91
    %95 = vset.pattern.permute.xlu0 0
    %96 = vperm.xlu0 %95, %v34
    %v97 = vpop.permute.xlu0 %96
    %100 = vset.pattern.permute.xlu0 0
    %101 = vperm.xlu0 %100, %v35
    %v102 = vpop.permute.xlu0 %101
    %105 = vset.pattern.permute.xlu0 0
    %106 = vperm.xlu0 %105, %v36
    %v107 = vpop.permute.xlu0 %106
    %110 = vset.pattern.permute.xlu0 0
    %111 = vperm.xlu0 %110, %v37
    %v112 = vpop.permute.xlu0 %111
    %115 = vset.pattern.permute.xlu0 0
    %116 = vperm.xlu0 %115, %v38
    %v117 = vpop.permute.xlu0 %116
    %v120 = vperm.slane %v22, 0
    %v122 = vmul.f32 %v42, %v120
    %v123 = vmul.f32 %v47, %v120
    %v124 = vmul.f32 %v52, %v120
    %v125 = vmul.f32 %v57, %v120
    %v126 = vmul.f32 %v62, %v120
    %v127 = vmul.f32 %v67, %v120
    %v128 = vmul.f32 %v72, %v120
    %v129 = vmul.f32 %v77, %v120
    %v130 = vmul.f32 %v82, %v120
    %v131 = vmul.f32 %v87, %v120
    %v132 = vmul.f32 %v92, %v120
    %v133 = vmul.f32 %v97, %v120
    %v134 = vmul.f32 %v102, %v120
    %v135 = vmul.f32 %v107, %v120
    %v136 = vmul.f32 %v112, %v120
    %v137 = vmul.f32 %v117, %v120
    %v138 = vld [vmem:[%s2] sm:$0xff]
    %v139 = vld [vmem:[%s2 + $0x8] sm:$0xff]
    %v140 = vld [vmem:[%s2 + $0x10] sm:$0xff]
    %v141 = vld [vmem:[%s2 + $0x18] sm:$0xff]
    %v142 = vld [vmem:[%s2 + $0x20] sm:$0xff]
    %v143 = vld [vmem:[%s2 + $0x28] sm:$0xff]
    %v144 = vld [vmem:[%s2 + $0x30] sm:$0xff]
    %v145 = vld [vmem:[%s2 + $0x38] sm:$0xff]
    %v146 = vld [vmem:[%s2 + $0x40] sm:$0xff]
    %v147 = vld [vmem:[%s2 + $0x48] sm:$0xff]
    %v148 = vld [vmem:[%s2 + $0x50] sm:$0xff]
    %v149 = vld [vmem:[%s2 + $0x58] sm:$0xff]
    %v150 = vld [vmem:[%s2 + $0x60] sm:$0xff]
    %v151 = vld [vmem:[%s2 + $0x68] sm:$0xff]
    %v152 = vld [vmem:[%s2 + $0x70] sm:$0xff]
    %v153 = vld [vmem:[%s2 + $0x78] sm:$0xff]
    %155 = vset.pattern.permute.xlu0 0
    %156 = vperm.xlu0 %155, %v138
    %v157 = vpop.permute.xlu0 %156
    %160 = vset.pattern.permute.xlu0 0
    %161 = vperm.xlu0 %160, %v139
    %v162 = vpop.permute.xlu0 %161
    %165 = vset.pattern.permute.xlu0 0
    %166 = vperm.xlu0 %165, %v140
    %v167 = vpop.permute.xlu0 %166
    %170 = vset.pattern.permute.xlu0 0
    %171 = vperm.xlu0 %170, %v141
    %v172 = vpop.permute.xlu0 %171
    %175 = vset.pattern.permute.xlu0 0
    %176 = vperm.xlu0 %175, %v142
    %v177 = vpop.permute.xlu0 %176
    %180 = vset.pattern.permute.xlu0 0
    %181 = vperm.xlu0 %180, %v143
    %v182 = vpop.permute.xlu0 %181
    %185 = vset.pattern.permute.xlu0 0
    %186 = vperm.xlu0 %185, %v144
    %v187 = vpop.permute.xlu0 %186
    %190 = vset.pattern.permute.xlu0 0
    %191 = vperm.xlu0 %190, %v145
    %v192 = vpop.permute.xlu0 %191
    %195 = vset.pattern.permute.xlu0 0
    %196 = vperm.xlu0 %195, %v146
    %v197 = vpop.permute.xlu0 %196
    %200 = vset.pattern.permute.xlu0 0
    %201 = vperm.xlu0 %200, %v147
    %v202 = vpop.permute.xlu0 %201
    %205 = vset.pattern.permute.xlu0 0
    %206 = vperm.xlu0 %205, %v148
    %v207 = vpop.permute.xlu0 %206
    %210 = vset.pattern.permute.xlu0 0
    %211 = vperm.xlu0 %210, %v149
    %v212 = vpop.permute.xlu0 %211
    %215 = vset.pattern.permute.xlu0 0
    %216 = vperm.xlu0 %215, %v150
    %v217 = vpop.permute.xlu0 %216
    %220 = vset.pattern.permute.xlu0 0
    %221 = vperm.xlu0 %220, %v151
    %v222 = vpop.permute.xlu0 %221
    %225 = vset.pattern.permute.xlu0 0
    %226 = vperm.xlu0 %225, %v152
    %v227 = vpop.permute.xlu0 %226
    %230 = vset.pattern.permute.xlu0 0
    %231 = vperm.xlu0 %230, %v153
    %v232 = vpop.permute.xlu0 %231
    %v234 = vadd.f32 %v122, %v157
    %v235 = vadd.f32 %v123, %v162
    %v236 = vadd.f32 %v124, %v167
    %v237 = vadd.f32 %v125, %v172
    %v238 = vadd.f32 %v126, %v177
    %v239 = vadd.f32 %v127, %v182
    %v240 = vadd.f32 %v128, %v187
    %v241 = vadd.f32 %v129, %v192
    %v242 = vadd.f32 %v130, %v197
    %v243 = vadd.f32 %v131, %v202
    %v244 = vadd.f32 %v132, %v207
    %v245 = vadd.f32 %v133, %v212
    %v246 = vadd.f32 %v134, %v217
    %v247 = vadd.f32 %v135, %v222
    %v248 = vadd.f32 %v136, %v227
    %v249 = vadd.f32 %v137, %v232
    %v250 = vmax.f32 %v234, 0.0
    %v251 = vmax.f32 %v235, 0.0
    %v252 = vmax.f32 %v236, 0.0
    %v253 = vmax.f32 %v237, 0.0
    %v254 = vmax.f32 %v238, 0.0
    %v255 = vmax.f32 %v239, 0.0
    %v256 = vmax.f32 %v240, 0.0
    %v257 = vmax.f32 %v241, 0.0
    %v258 = vmax.f32 %v242, 0.0
    %v259 = vmax.f32 %v243, 0.0
    %v260 = vmax.f32 %v244, 0.0
    %v261 = vmax.f32 %v245, 0.0
    %v262 = vmax.f32 %v246, 0.0
    %v263 = vmax.f32 %v247, 0.0
    %v264 = vmax.f32 %v248, 0.0
    %v265 = vmax.f32 %v249, 0.0
    %v266 = vld [vmem:[%s3] sm:$0xff]
    %v267 = vld [vmem:[%s3 + $0x8] sm:$0xff]
    %v268 = vld [vmem:[%s3 + $0x10] sm:$0xff]
    %v269 = vld [vmem:[%s3 + $0x18] sm:$0xff]
    %v270 = vld [vmem:[%s3 + $0x20] sm:$0xff]
    %v271 = vld [vmem:[%s3 + $0x28] sm:$0xff]
    %v272 = vld [vmem:[%s3 + $0x30] sm:$0xff]
    %v273 = vld [vmem:[%s3 + $0x38] sm:$0xff]
    %v274 = vld [vmem:[%s3 + $0x40] sm:$0xff]
    %v275 = vld [vmem:[%s3 + $0x48] sm:$0xff]
    %v276 = vld [vmem:[%s3 + $0x50] sm:$0xff]
    %v277 = vld [vmem:[%s3 + $0x58] sm:$0xff]
    %v278 = vld [vmem:[%s3 + $0x60] sm:$0xff]
    %v279 = vld [vmem:[%s3 + $0x68] sm:$0xff]
    %v280 = vld [vmem:[%s3 + $0x70] sm:$0xff]
    %v281 = vld [vmem:[%s3 + $0x78] sm:$0xff]
    %283 = vset.pattern.permute.xlu0 0
    %284 = vperm.xlu0 %283, %v266
    %v285 = vpop.permute.xlu0 %284
    %288 = vset.pattern.permute.xlu0 0
    %289 = vperm.xlu0 %288, %v267
    %v290 = vpop.permute.xlu0 %289
    %293 = vset.pattern.permute.xlu0 0
    %294 = vperm.xlu0 %293, %v268
    %v295 = vpop.permute.xlu0 %294
    %298 = vset.pattern.permute.xlu0 0
    %299 = vperm.xlu0 %298, %v269
    %v300 = vpop.permute.xlu0 %299
    %303 = vset.pattern.permute.xlu0 0
    %304 = vperm.xlu0 %303, %v270
    %v305 = vpop.permute.xlu0 %304
    %308 = vset.pattern.permute.xlu0 0
    %309 = vperm.xlu0 %308, %v271
    %v310 = vpop.permute.xlu0 %309
    %313 = vset.pattern.permute.xlu0 0
    %314 = vperm.xlu0 %313, %v272
    %v315 = vpop.permute.xlu0 %314
    %318 = vset.pattern.permute.xlu0 0
    %319 = vperm.xlu0 %318, %v273
    %v320 = vpop.permute.xlu0 %319
    %323 = vset.pattern.permute.xlu0 0
    %324 = vperm.xlu0 %323, %v274
    %v325 = vpop.permute.xlu0 %324
    %328 = vset.pattern.permute.xlu0 0
    %329 = vperm.xlu0 %328, %v275
    %v330 = vpop.permute.xlu0 %329
    %333 = vset.pattern.permute.xlu0 0
    %334 = vperm.xlu0 %333, %v276
    %v335 = vpop.permute.xlu0 %334
    %338 = vset.pattern.permute.xlu0 0
    %339 = vperm.xlu0 %338, %v277
    %v340 = vpop.permute.xlu0 %339
    %343 = vset.pattern.permute.xlu0 0
    %344 = vperm.xlu0 %343, %v278
    %v345 = vpop.permute.xlu0 %344
    %348 = vset.pattern.permute.xlu0 0
    %349 = vperm.xlu0 %348, %v279
    %v350 = vpop.permute.xlu0 %349
    %353 = vset.pattern.permute.xlu0 0
    %354 = vperm.xlu0 %353, %v280
    %v355 = vpop.permute.xlu0 %354
    %358 = vset.pattern.permute.xlu0 0
    %359 = vperm.xlu0 %358, %v281
    %v360 = vpop.permute.xlu0 %359
    %v362 = vmul.f32 %v250, %v285
    %v363 = vmul.f32 %v251, %v290
    %v364 = vmul.f32 %v252, %v295
    %v365 = vmul.f32 %v253, %v300
    %v366 = vmul.f32 %v254, %v305
    %v367 = vmul.f32 %v255, %v310
    %v368 = vmul.f32 %v256, %v315
    %v369 = vmul.f32 %v257, %v320
    %v370 = vmul.f32 %v258, %v325
    %v371 = vmul.f32 %v259, %v330
    %v372 = vmul.f32 %v260, %v335
    %v373 = vmul.f32 %v261, %v340
    %v374 = vmul.f32 %v262, %v345
    %v375 = vmul.f32 %v263, %v350
    %v376 = vmul.f32 %v264, %v355
    %v377 = vmul.f32 %v265, %v360
    %v378 = vadd.f32 %v362, %v363
    %v379 = vadd.f32 %v378, %v364
    %v380 = vadd.f32 %v379, %v365
    %v381 = vadd.f32 %v380, %v366
    %v382 = vadd.f32 %v381, %v367
    %v383 = vadd.f32 %v382, %v368
    %v384 = vadd.f32 %v383, %v369
    %v385 = vadd.f32 %v384, %v370
    %v386 = vadd.f32 %v385, %v371
    %v387 = vadd.f32 %v386, %v372
    %v388 = vadd.f32 %v387, %v373
    %v389 = vadd.f32 %v388, %v374
    %v390 = vadd.f32 %v389, %v375
    %v391 = vadd.f32 %v390, %v376
    %v392 = vadd.f32 %v391, %v377
    %v393 = vrot.slane %v392, 4
    %v394 = vadd.f32 %v392, %v393
    %v395 = vrot.slane %v394, 2
    %v396 = vadd.f32 %v394, %v395
    %v397 = vrot.slane %v396, 1
    %v398 = vadd.f32 %v396, %v397
    %s399 = sld [smem:[#allocation2]]
    %v400 = vstv %s399
    %v401 = vadd.f32 %v398, %v400
    %402 = vst [vmem:[#allocation3] sm:$0x1] %v401
    // Predicated region
    $region22: #{tpu_custom_call.1} parent=1 // pred_check
      _
    $region23: #{tpu_custom_call.1} parent=1 // pred_check_branch
      %404 = sbr.rel (0) target = $region25
    $region24: #{tpu_custom_call.1} parent=1 // pred_region
      %406 = vsyncadd [#allocation4], 0
      %s408 = sshll.u32 [#allocation3], 4
      %s409 = int_to_ptr.vmem [resolvable:$true] %s408
      %s410 = sshll.u32 %s5, 4
      %s411 = int_to_ptr.hbm [resolvable:$true] %s410
      %413 = dma.vmem_to_hbm [thread:$0]  %s409, 16, %s411, [#allocation4]
    $region25: #{tpu_custom_call.1} parent=1 // pred_fallthru
      _
    // Predicated region
    $region26: #{tpu_custom_call.1} parent=1 // pred_check
      _
    $region27: #{tpu_custom_call.1} parent=1 // pred_check_branch
      %415 = sbr.rel (0) target = $region29
    $region28: #{tpu_custom_call.1} parent=1 // pred_region
      %417 = dma.done [#allocation4], 16
    $region29: #{tpu_custom_call.1} parent=1 // pred_fallthru
      _
    %418 = vsyncpa [#allocation4], 1

</llo_original>
